<compile_context>
chip_gen: v7x
topology: tpu7x:2x2x1
jax: 0.10.0
libtpu: 0.0.40
codegen_flags: <defaults>
</compile_context>

<pallas_src>
import jax
import jax.numpy as jnp
from jax.experimental import pallas as pl
from jax.experimental.pallas import tpu as pltpu


def _project_kernel(h_ref, w_ref, z_ref):
    # z = fc(h): f32 MXU matmul, stored bf16 (halves z's HBM/VMEM footprint and
    # feeds stage 2's bf16 matmuls without an extra cast pass).
    z_ref[...] = jnp.dot(h_ref[...], w_ref[...],
                         preferred_element_type=jnp.float32).astype(z_ref.dtype)


def _attend_kernel(z_ref, adj_ref, out_ref):
    # z_ref:   (N_pad, OUT_PAD) bf16 -- resident, constant index_map.
    # adj_ref: (T, N_pad)       int8 -- streamed per dst-row tile.
    # out_ref: (T, OUT_PAD)     f32
    t = out_ref.shape[0]
    row0 = pl.multiple_of(pl.program_id(0) * t, t)

    z_src = z_ref[...]                           # all sources (bf16)
    z_dst = z_ref[pl.ds(row0, t), :]             # dst slice of the resident z

    # s[dst, src] = z_dst . z_src -- bf16 operands, f32 MXU accumulation;
    # contraction over the LAST axis of both so no XLU transpose materializes.
    s = jax.lax.dot_general(
        z_dst, z_src,
        dimension_numbers=(((1,), (1,)), ((), ())),
        preferred_element_type=jnp.float32)      # (T, N_pad) f32

    # Fused leaky_relu(slope=0.2) + adjacency mask in a single VPU pass.
    mask = adj_ref[...] > 0
    e_m = jnp.where(mask, jnp.where(s > 0, s, 0.2 * s), jnp.float32(-1e30))

    # Row softmax over incoming edges (f32). exp(-1e30 - m) underflows to
    # exactly 0, so no post-exp re-masking is needed; a fully-masked padded row
    # still yields a finite denom (== N_pad), never a divide-by-zero.
    m = jnp.max(e_m, axis=1, keepdims=True)
    p = jnp.exp(e_m - m)
    denom = jnp.sum(p, axis=1, keepdims=True)
    r = pl.reciprocal(denom, approx=True)        # EUP slot, ~free
    r = r * (2.0 - denom * r)                    # one Newton step -> ~f32 acc.
    alpha = (p * r).astype(jnp.bfloat16)         # bf16 feed for the MXU

    # h_dst = sum_src alpha[dst, src] * z_src  (bf16 x bf16, f32 accumulate).
    agg = jnp.dot(alpha, z_src, preferred_element_type=jnp.float32)

    # ELU (alpha = 1). Padded lanes stay exactly 0.
    out_ref[...] = jnp.where(agg > 0, agg, jnp.expm1(agg))


def _default_tile_dst():
    # Smaller dst tiles on 64 MiB-VMEM parts (v7x), larger on 128 MiB parts.
    try:
        vmem = pltpu.get_tpu_info().vmem_capacity_bytes
    except Exception:
        vmem = 128 * 1024 * 1024
    return 128 if vmem <= 64 * 1024 * 1024 else 256


def gat_layer(h, w_fc, adj, *, tile_dst=None):
    """h: (N, in_dim) f32, w_fc: (in_dim, out_dim) f32, adj: (N, N) mask.

    Returns (N, out_dim) f32 = elu(softmax_src(mask(leaky_relu(z z^T))) @ z)
    with z = h @ w_fc.
    """
    N, in_dim = h.shape
    out_dim = w_fc.shape[1]

    # Lane-dense padding of the feature axis (multiple of 128): unmasked vector
    # stores + full MXU tiles. Padded columns stay zero and are sliced off.
    out_pad = max(128, ((out_dim + 127) // 128) * 128)

    if tile_dst is None:
        tile_dst = _default_tile_dst()
    # Keep the (T, N_pad) f32 softmax temporaries + resident bf16 z under
    # ~48 MiB so the kernel also fits v7x's 64 MiB physical VMEM.
    approx_n = max(128, ((N + 127) // 128) * 128)
    while tile_dst > 32 and (6 * tile_dst * approx_n * 4
                             + approx_n * out_pad * 2) > 48 * 2**20:
        tile_dst //= 2
    # int8 adjacency -> dst tile must be a multiple of 32 (sublane packing).
    tile_dst = max(32, (min(tile_dst, max(N, 32)) // 32) * 32)

    n_pad = ((N + tile_dst - 1) // tile_dst) * tile_dst
    n_tiles = n_pad // tile_dst

    f32, bf16 = jnp.float32, jnp.bfloat16

    h_p = h.astype(f32)
    if n_pad != N:
        h_p = jnp.zeros((n_pad, in_dim), f32).at[:N, :].set(h_p)
    w_p = jnp.zeros((in_dim, out_pad), f32).at[:, :out_dim].set(w_fc.astype(f32))

    # adj is only ever compared > 0 -> stream it as int8 (4x less HBM traffic
    # on the dominant N^2 stream vs f32). Skip the extra O(N^2) re-pack when
    # the caller already supplies int8 in the final padded layout.
    if adj.dtype == jnp.int8 and adj.shape == (n_pad, n_pad):
        adj_p = adj
    elif n_pad == N:
        adj_p = (adj > 0).astype(jnp.int8)
    else:
        adj_p = (jnp.zeros((n_pad, n_pad), jnp.int8)
                 .at[:N, :N].set((adj > 0).astype(jnp.int8)))

    # Stage-2 VMEM budget: resident z (1 buffer) + double-buffered int8 adj
    # rows + double-buffered f32 out + (T, N_pad) softmax temporaries.
    vmem_bytes = (n_pad * out_pad * 2            # resident z, bf16, 1 buffer
                  + 2 * tile_dst * n_pad * 1     # adj int8, double-buffered
                  + 2 * tile_dst * out_pad * 4   # out f32, double-buffered
                  + 6 * tile_dst * n_pad * 4     # s / e_m / p (+ alpha bf16)
                  + 4 * tile_dst * out_pad * 4)  # z_dst slice / agg
    vmem_limit = int(min(max(vmem_bytes, 32 * 2**20), 64 * 2**20))

    def run(single_buffer):
        def resident(shape, index_map):
            # Blocks with a constant index_map never change between grid steps;
            # a single buffer saves a full extra copy of z (and of the fc
            # weight) in VMEM versus the default double-buffering.
            if single_buffer:
                return pl.BlockSpec(shape, index_map,
                                    pipeline_mode=pl.Buffered(1))
            return pl.BlockSpec(shape, index_map)

        # Stage 1: z = h @ w, row-tiled, parallel across TensorCores.
        z = pl.pallas_call(
            _project_kernel,
            out_shape=jax.ShapeDtypeStruct((n_pad, out_pad), bf16),
            grid=(n_tiles,),
            in_specs=[
                pl.BlockSpec((tile_dst, in_dim), lambda i: (i, 0)),
                resident((in_dim, out_pad), lambda i: (0, 0)),
            ],
            out_specs=pl.BlockSpec((tile_dst, out_pad), lambda i: (i, 0)),
            compiler_params=pltpu.CompilerParams(
                dimension_semantics=("parallel",)),
        )(h_p, w_p)

        # Stage 2: attention + masked softmax + aggregation + ELU, gridded over
        # destination-row tiles. z (all sources) is resident; the dst slice is
        # taken from it in-kernel, so only int8 adj rows stream per grid step.
        return pl.pallas_call(
            _attend_kernel,
            out_shape=jax.ShapeDtypeStruct((n_pad, out_pad), f32),
            grid=(n_tiles,),
            in_specs=[
                resident((n_pad, out_pad), lambda i: (0, 0)),        # z, all src
                pl.BlockSpec((tile_dst, n_pad), lambda i: (i, 0)),   # adj rows
            ],
            out_specs=pl.BlockSpec((tile_dst, out_pad), lambda i: (i, 0)),
            compiler_params=pltpu.CompilerParams(
                dimension_semantics=("parallel",),   # dst rows across TCs
                vmem_limit_bytes=vmem_limit),
        )(z, adj_p)

    try:
        out = run(single_buffer=True)
    except Exception:
        # Graceful fallback if this JAX build rejects pl.Buffered(1): identical
        # semantics, just default double-buffering of the resident blocks.
        out = run(single_buffer=False)

    return out[:N, :out_dim]


def reference(h, w_fc, adj):
    """Pure-JAX f32 reference of the same forward semantics."""
    z = h @ w_fc
    s = z @ z.T
    e = jnp.where(s > 0, s, 0.2 * s)
    mask = adj > 0
    e_m = jnp.where(mask, e, -1e30)
    m = jnp.max(e_m, axis=1, keepdims=True)
    p = jnp.where(mask, jnp.exp(e_m - m), 0.0)
    alpha = p / jnp.sum(p, axis=1, keepdims=True)
    agg = alpha @ z
    return jnp.where(agg > 0, agg, jnp.expm1(agg))


if __name__ == "__main__":
    key = jax.random.PRNGKey(0)
    N, in_dim, out_dim = 64, 16, 32

    k_h, k_w, k_a = jax.random.split(key, 3)

    # node features
    h = jax.random.normal(k_h, (N, in_dim), dtype=jnp.float32)

    # fc weight (nn.Linear(in_dim, out_dim, bias=False)), xavier-normal-like.
    gain = jnp.sqrt(2.0)  # relu gain
    std = gain * jnp.sqrt(2.0 / (in_dim + out_dim))
    w_fc = std * jax.random.normal(k_w, (in_dim, out_dim), dtype=jnp.float32)

    # random sparse adjacency adj[dst, src] with self-loops (the DGL reduce
    # requires every destination to receive at least one message).
    adj = (jax.random.uniform(k_a, (N, N)) < 0.15).astype(jnp.float32)
    adj = jnp.maximum(adj, jnp.eye(N, dtype=jnp.float32))

    # TODO(synk): m_fc, d_fc, dropout exist in __init__ but are unused in
    # forward(), so they are intentionally omitted.
    # TODO(synk): block-sparse variant (PrefetchScalarGridSpec over nonzero adj
    # column blocks + pl.when skip) and an online-softmax src-chunk loop are
    # the next wins at real graph scale; dense N^2 is fine at this size.

    # tile_dst=32 so the small demo still exercises the multi-tile grid path.
    out = gat_layer(h, w_fc, adj, tile_dst=32)
    out = jax.block_until_ready(out)

    ref = reference(h, w_fc, adj)
    assert out.shape == (N, out_dim)
    # bf16 MXU matmuls vs f32 reference: loose elementwise bound plus a tight
    # relative Frobenius-norm bound.
    assert jnp.allclose(out, ref, atol=1e-1, rtol=1e-1), "elementwise mismatch"
    rel = jnp.linalg.norm(out - ref) / (jnp.linalg.norm(ref) + 1e-12)
    assert rel < 2e-2, f"relative error too large: {rel}"

    print("KERNEL_OK")
</pallas_src>

<mosaic_0001>
module attributes {stable_mosaic.version = 11 : i64} {
  func.func @_project_kernel(%arg0: i32, %arg1: memref<32x16xf32, #tpu.memory_space<vmem>>, %arg2: memref<16x128xf32, #tpu.memory_space<vmem>>, %arg3: memref<32x128xbf16, #tpu.memory_space<vmem>>) attributes {dimension_semantics = [#tpu.dimension_semantics<parallel>], iteration_bounds = array<i64: 2>, scalar_prefetch = 0 : i64, scratch_operands = 0 : i64, tpu.core_type = #tpu.core_type<tc>, window_params = [{transform_indices = @transform_0, window_bounds = array<i64: 32, 16>}, {pipeline_mode = #tpu.pipeline_mode<synchronous>, transform_indices = @transform_1, window_bounds = array<i64: 16, 128>}, {transform_indices = @transform_2, window_bounds = array<i64: 32, 128>}]} {
    %c0 = arith.constant 0 : index
    %c0_0 = arith.constant 0 : index
    %0 = vector.load %arg1[%c0, %c0_0] : memref<32x16xf32, #tpu.memory_space<vmem>>, vector<32x16xf32>
    %c0_1 = arith.constant 0 : index
    %c0_2 = arith.constant 0 : index
    %1 = vector.load %arg2[%c0_1, %c0_2] : memref<16x128xf32, #tpu.memory_space<vmem>>, vector<16x128xf32>
    %cst = arith.constant dense<0.000000e+00> : vector<32x128xf32>
    %2 = tpu.matmul %0, %1, %cst {dimension_numbers = #tpu.dot_dimension_numbers<[1], [0], [0], [1], [0, 0, 1, 1], [], []>} : vector<32x16xf32>, vector<16x128xf32>, vector<32x128xf32> -> vector<32x128xf32>
    %3 = arith.truncf %2 : vector<32x128xf32> to vector<32x128xbf16>
    %c0_3 = arith.constant 0 : index
    %c0_4 = arith.constant 0 : index
    %4 = vector.load %arg3[%c0_3, %c0_4] : memref<32x128xbf16, #tpu.memory_space<vmem>>, vector<32x128xbf16>
    tpu.vector_store %arg3[%c0_3, %c0_4], %3 {strides = array<i32>} : memref<32x128xbf16, #tpu.memory_space<vmem>>, vector<32x128xbf16>,
    return
  }
  func.func @transform_0(%arg0: i32) -> (i32, i32) {
    %c0_i32 = arith.constant 0 : i32
    %c0_i32_0 = arith.constant 0 : i32
    return %arg0, %c0_i32 : i32, i32
  }
  func.func @transform_1(%arg0: i32) -> (i32, i32) {
    %c0_i32 = arith.constant 0 : i32
    %c0_i32_0 = arith.constant 0 : i32
    %c0_i32_1 = arith.constant 0 : i32
    return %c0_i32, %c0_i32_0 : i32, i32
  }
  func.func @transform_2(%arg0: i32) -> (i32, i32) {
    %c0_i32 = arith.constant 0 : i32
    %c0_i32_0 = arith.constant 0 : i32
    return %arg0, %c0_i32 : i32, i32
  }
}

module attributes {stable_mosaic.version = 11 : i64} {
  func.func @_project_kernel(%arg0: i32, %arg1: memref<32x16xf32, #tpu.memory_space<vmem>>, %arg2: memref<16x128xf32, #tpu.memory_space<vmem>>, %arg3: memref<32x128xbf16, #tpu.memory_space<vmem>>) attributes {dimension_semantics = [#tpu.dimension_semantics<parallel>], iteration_bounds = array<i64: 2>, scalar_prefetch = 0 : i64, scratch_operands = 0 : i64, tpu.core_type = #tpu.core_type<tc>, window_params = [{transform_indices = @transform_0, window_bounds = array<i64: 32, 16>}, {pipeline_mode = #tpu.pipeline_mode<synchronous>, transform_indices = @transform_1, window_bounds = array<i64: 16, 128>}, {transform_indices = @transform_2, window_bounds = array<i64: 32, 128>}]} {
    %c0 = arith.constant 0 : index
    %c0_0 = arith.constant 0 : index
    %0 = vector.load %arg1[%c0, %c0_0] : memref<32x16xf32, #tpu.memory_space<vmem>>, vector<32x16xf32>
    %c0_1 = arith.constant 0 : index
    %c0_2 = arith.constant 0 : index
    %1 = vector.load %arg2[%c0_1, %c0_2] : memref<16x128xf32, #tpu.memory_space<vmem>>, vector<16x128xf32>
    %cst = arith.constant dense<0.000000e+00> : vector<32x128xf32>
    %2 = tpu.matmul %0, %1, %cst {dimension_numbers = #tpu.dot_dimension_numbers<[1], [0], [0], [1], [0, 0, 1, 1], [], []>} : vector<32x16xf32>, vector<16x128xf32>, vector<32x128xf32> -> vector<32x128xf32>
    %3 = arith.truncf %2 : vector<32x128xf32> to vector<32x128xbf16>
    %c0_3 = arith.constant 0 : index
    %c0_4 = arith.constant 0 : index
    %4 = vector.load %arg3[%c0_3, %c0_4] : memref<32x128xbf16, #tpu.memory_space<vmem>>, vector<32x128xbf16>
    tpu.vector_store %arg3[%c0_3, %c0_4], %3 {strides = array<i32>} : memref<32x128xbf16, #tpu.memory_space<vmem>>, vector<32x128xbf16>,
    return
  }
  func.func @transform_0(%arg0: i32) -> (i32, i32) {
    %c0_i32 = arith.constant 0 : i32
    %c0_i32_0 = arith.constant 0 : i32
    return %arg0, %c0_i32 : i32, i32
  }
  func.func @transform_1(%arg0: i32) -> (i32, i32) {
    %c0_i32 = arith.constant 0 : i32
    %c0_i32_0 = arith.constant 0 : i32
    %c0_i32_1 = arith.constant 0 : i32
    return %c0_i32, %c0_i32_0 : i32, i32
  }
  func.func @transform_2(%arg0: i32) -> (i32, i32) {
    %c0_i32 = arith.constant 0 : i32
    %c0_i32_0 = arith.constant 0 : i32
    return %arg0, %c0_i32 : i32, i32
  }
}

</mosaic_0001>

<llo_original>
// kernel: tpu_custom_call.1
$region0: #{tpu_custom_call.1}
  #allocation0 [shape = 'u32[]', space=smem, size = 0x4, offset = 0x4, fixed_abs, tag = 'smem constant byte address 0x4 - core index']
  #allocation1 [shape = 'u32[144,128]{1,0:T(1,128)}', space=vmem, size = 0x12000, scoped, tag = 'internal scratch']
  %s0 = inlined_call_operand.vmem [shape: f32[64,16], index: 0, kind: input, shape index: {}]
  %s1 = inlined_call_operand.vmem [shape: f32[16,128], index: 1, kind: input, shape index: {}]
  %s2 = inlined_call_operand.hbm [shape: bf16[64,128], index: 2, kind: output, shape index: {}]
  %s3 = sld [smem:[#allocation0]]
  $region41: #{tpu_custom_call.1} parent=0
    _
  %s5 = ssub.s32 1, %s3
  %s6 = scalar_select 0, %s5, %s3
  $region1: #{tpu_custom_call.1} parent=0
    #allocation2 [shape = 'u8[16384]{0}', space=vmem, size = 0x4000, scoped, tag = 'output window, operand 0']
    #allocation3 [shape = 's32[2]{0}', space=sflag, size = 0x8, scoped, tag = 'scoped memory for tpu_custom_call.1']
    %7 = vsyncpa [#allocation3], 0
    %s8 = scalar_lea.sflag [#allocation3], 1
    %9 = vsyncpa %s8, 0
    loop: start=0, step=1, limit=4
    $region2: #{tpu_custom_call.1} parent=1 // loop_pre_header
      _
    $region3: #{tpu_custom_call.1} parent=1 // loop_header
      %s11 = sphi 0, %s15
      %p12 = scmp.ge.s32.totalorder %s11, 4
      %s21 = sphi 0, %s23
      %s24 = sphi 0, %s21
      %s25 = sphi 0, %s24
      %s41 = sphi 0, %s25
      %s45 = sphi 0, %s45
      %s47 = sphi 0, %s45
      %s48 = sphi 0, %s47
      %s62 = sphi 0, %s48
      %s68 = sphi 0, %s70
      %s71 = sphi 0, %s68
      %s72 = sphi 0, %s71
      %s88 = sphi 0, %s72
    $region4: #{tpu_custom_call.1} parent=1 // loop_header_branch
      %14 = sbr.rel (%p12) target = $region8
    $region5: #{tpu_custom_call.1} parent=1 // loop_body
      %s16 = ssub.s32 %s11, 1
      %s17 = ssub.s32 %s11, 2
      %s18 = sadd.s32 %s11, 1
      %s19 = ssub.s32 %s11, %s18
      %p20 = scmp.eq.s32.totalorder %s19, 0
      %s22 = sadd.s32 %s21, 1
      %s23 = scalar_select %p20, %s21, %s22
      %p26 = pneg %p20
      %p27 = scmp.eq.s32.totalorder %s11, 1
      %p28 = por %p26, %p27
      %p29 = scmp.ne.s32.totalorder %s21, %s24
      %p30 = scmp.eq.s32.totalorder %s11, 0
      %p31 = por %p29, %p30
      %p32 = scmp.ne.s32.totalorder %s21, %s24
      %p33 = scmp.eq.s32.totalorder %s16, 1
      %p34 = por %p32, %p33
      %p35 = scmp.ne.s32.totalorder %s24, %s25
      %p36 = scmp.eq.s32.totalorder %s16, 0
      %p37 = por %p35, %p36
      %p38 = scmp.ne.s32.totalorder %s24, %s25
      %p39 = scmp.eq.s32.totalorder %s17, 1
      %p40 = por %p38, %p39
      %p42 = scmp.ne.s32.totalorder %s25, %s41
      %p43 = scmp.eq.s32.totalorder %s17, 0
      %p44 = por %p42, %p43
      %s46 = sadd.s32 %s45, 1
      %p49 = scmp.eq.s32.totalorder %s11, 1
      %p50 = scmp.ne.s32.totalorder %s45, %s47
      %p51 = scmp.eq.s32.totalorder %s11, 0
      %p52 = por %p50, %p51
      %p53 = scmp.ne.s32.totalorder %s45, %s47
      %p54 = scmp.eq.s32.totalorder %s16, 1
      %p55 = por %p53, %p54
      %p56 = scmp.ne.s32.totalorder %s47, %s48
      %p57 = scmp.eq.s32.totalorder %s16, 0
      %p58 = por %p56, %p57
      %p59 = scmp.ne.s32.totalorder %s47, %s48
      %p60 = scmp.eq.s32.totalorder %s17, 1
      %p61 = por %p59, %p60
      %p63 = scmp.ne.s32.totalorder %s48, %s62
      %p64 = scmp.eq.s32.totalorder %s17, 0
      %p65 = por %p63, %p64
      %s66 = ssub.s32 %s11, %s18
      %p67 = scmp.eq.s32.totalorder %s66, 0
      %s69 = sadd.s32 %s68, 1
      %s70 = scalar_select %p67, %s68, %s69
      %p73 = pneg %p67
      %p74 = scmp.eq.s32.totalorder %s11, 1
      %p75 = por %p73, %p74
      %p76 = scmp.ne.s32.totalorder %s68, %s71
      %p77 = scmp.eq.s32.totalorder %s11, 0
      %p78 = por %p76, %p77
      %p79 = scmp.ne.s32.totalorder %s68, %s71
      %p80 = scmp.eq.s32.totalorder %s16, 1
      %p81 = por %p79, %p80
      %p82 = scmp.ne.s32.totalorder %s71, %s72
      %p83 = scmp.eq.s32.totalorder %s16, 0
      %p84 = por %p82, %p83
      %p85 = scmp.ne.s32.totalorder %s71, %s72
      %p86 = scmp.eq.s32.totalorder %s17, 1
      %p87 = por %p85, %p86
      %p89 = scmp.ne.s32.totalorder %s72, %s88
      %p90 = scmp.eq.s32.totalorder %s17, 0
      %p91 = por %p89, %p90
      %p92 = scmp.le.s32.totalorder 1, %s11
      %p93 = scmp.lt.s32.totalorder %s11, 3
      %p94 = pnand %p92, %p93
      %p95 = pneg %p94
      // Predicated region
      $region9: #{tpu_custom_call.1} parent=5 // pred_check
        _
      $region10: #{tpu_custom_call.1} parent=5 // pred_check_branch
        %97 = sbr.rel (%p94) target = $region12
      $region11: #{tpu_custom_call.1} parent=5 // pred_region
        %s98 = ssub.s32 %s11, 1
        // Predicated region
        $region13: #{tpu_custom_call.1} parent=11 // pred_check
          %p99 = pneg %p58
        $region14: #{tpu_custom_call.1} parent=11 // pred_check_branch
          %101 = sbr.rel (%p99) target = $region16
        $region15: #{tpu_custom_call.1} parent=11 // pred_region
          _
        $region16: #{tpu_custom_call.1} parent=11 // pred_fallthru
          _
      $region12: #{tpu_custom_call.1} parent=5 // pred_fallthru
        _
      %p102 = scmp.lt.s32.totalorder %s11, 2
      // Predicated region
      $region17: #{tpu_custom_call.1} parent=5 // pred_check
        %p103 = pneg %p102
      $region18: #{tpu_custom_call.1} parent=5 // pred_check_branch
        %105 = sbr.rel (%p103) target = $region20
      $region19: #{tpu_custom_call.1} parent=5 // pred_region
        // Predicated region
        $region21: #{tpu_custom_call.1} parent=19 // pred_check
          %p106 = pneg %p31
        $region22: #{tpu_custom_call.1} parent=19 // pred_check_branch
          %108 = sbr.rel (%p106) target = $region24
        $region23: #{tpu_custom_call.1} parent=19 // pred_region
          %s109 = smul.u32 4, %s11
          %p110 = scmp.lt.s32.totalorder %s109, 7
          %s111 = scalar_select %p110, %s109, 7
          %s112 = smul.addr %s111, 8
          %s113 = scalar_lea.vmem %s0, %s112
          %s114 = smul.u32 4, %s11
        $region24: #{tpu_custom_call.1} parent=19 // pred_fallthru
          _
      $region20: #{tpu_custom_call.1} parent=5 // pred_fallthru
        _
      %p115 = scmp.le.s32.totalorder 1, %s11
      %p116 = scmp.lt.s32.totalorder %s11, 3
      %p117 = pnand %p115, %p116
      %p118 = pneg %p117
      // Predicated region
      $region25: #{tpu_custom_call.1} parent=5 // pred_check
        _
      $region26: #{tpu_custom_call.1} parent=5 // pred_check_branch
        %120 = sbr.rel (%p117) target = $region28
      $region27: #{tpu_custom_call.1} parent=5 // pred_region
        %s121 = ssub.s32 %s11, 1
        %s122 = smul.u32 4, %s16
        %p123 = scmp.lt.s32.totalorder %s122, 7
        %s124 = scalar_select %p123, %s122, 7
        %s125 = smul.addr %s124, 8
        %s126 = scalar_lea.vmem %s0, %s125
        %p127 = pneg %p37
        %p128 = pneg %p34
        %p129 = pneg %p58
        %p130 = pneg %p55
        %p131 = pneg %p84
        %p132 = pneg %p81
        %s133 = sand.u32 %s71, 1
        %s134 = scalar_lea.sflag [#allocation3], %s133
        %s135 = sand.u32 %s71, 1
        %s136 = smul.addr %s135, 16
        %s137 = scalar_lea.vmem [#allocation2], %s136
        %s138 = smul.u32 4, %s16
        %p139 = scmp.lt.s32.totalorder %s138, 7
        %s140 = scalar_select %p139, %s138, 7
        %s141 = smul.addr %s140, 8
        %s142 = scalar_lea.vmem %s0, %s141
        %s143 = smul.u32 4, %s16
        %s144 = smul.u32 4, %s16
        %v145 = vld [vmem:[%s142] sm:$0xff]
        %v146 = vld [vmem:[%s142 + $0x8] sm:$0xff]
        %v147 = vld [vmem:[%s142 + $0x10] sm:$0xff]
        %v148 = vld [vmem:[%s142 + $0x18] sm:$0xff]
        %v149 = vld [vmem:[%s1] sm:$0xff]
        %v150 = vld [vmem:[%s1 + $0x8] sm:$0xff]
        %vm151 = vcmask 130048
        %v153 = vsel %vm151, %v145, 0
        %v156 = vsel %vm151, %v146, 0
        %v159 = vsel %vm151, %v147, 0
        %v162 = vsel %vm151, %v148, 0
        %164 = vmatprep.subr.mxu0 0.0
        %165 = vmatpush1.msra.mxu0 %v149
        %166 = vmatprep.subr.mxu0 0.0
        %167 = vmatpush1.msra.mxu0 %v150
        %168 = vmatprep.subr.mxu0 0.0
        %169 = vmatpush1.msra.mxu0 0.0
        %170 = vmatprep.subr.mxu0 0.0
        %171 = vmatpush1.msra.mxu0 0.0
        %172 = vmatprep.subr.mxu0 0.0
        %173 = vmatpush1.msra.mxu0 0.0
        %174 = vmatprep.subr.mxu0 0.0
        %175 = vmatpush1.msra.mxu0 0.0
        %176 = vmatprep.subr.mxu0 0.0
        %177 = vmatpush1.msra.mxu0 0.0
        %178 = vmatprep.subr.mxu0 0.0
        %179 = vmatpush1.msra.mxu0 0.0
        %180 = vmatprep.subr.mxu0 0.0
        %181 = vmatpush1.msra.mxu0 0.0
        %182 = vmatprep.subr.mxu0 0.0
        %183 = vmatpush1.msra.mxu0 0.0
        %184 = vmatprep.subr.mxu0 0.0
        %185 = vmatpush1.msra.mxu0 0.0
        %186 = vmatprep.subr.mxu0 0.0
        %187 = vmatpush1.msra.mxu0 0.0
        %188 = vmatprep.subr.mxu0 0.0
        %189 = vmatpush1.msra.mxu0 0.0
        %190 = vmatprep.subr.mxu0 0.0
        %191 = vmatpush1.msra.mxu0 0.0
        %192 = vmatprep.subr.mxu0 0.0
        %193 = vmatpush1.msra.mxu0 0.0
        %194 = vmatprep.subr.mxu0 0.0
        %195 = vmatpush1.msra.mxu0 0.0
        %196 = vmatprep.subr.mxu0 0.0
        %197 = vmatpush1.msra.mxu0 0.0
        %198 = vmatprep.subr.mxu0 0.0
        %199 = vmatpush1.msra.mxu0 0.0
        %200 = vmatprep.subr.mxu0 0.0
        %201 = vmatpush1.msra.mxu0 0.0
        %202 = vmatprep.subr.mxu0 0.0
        %203 = vmatpush1.msra.mxu0 0.0
        %204 = vmatprep.subr.mxu0 0.0
        %205 = vmatpush1.msra.mxu0 0.0
        %206 = vmatprep.subr.mxu0 0.0
        %207 = vmatpush1.msra.mxu0 0.0
        %208 = vmatprep.subr.mxu0 0.0
        %209 = vmatpush1.msra.mxu0 0.0
        %210 = vmatprep.subr.mxu0 0.0
        %211 = vmatpush1.msra.mxu0 0.0
        %212 = vmatprep.subr.mxu0 0.0
        %213 = vmatpush1.msra.mxu0 0.0
        %214 = vmatprep.subr.mxu0 0.0
        %215 = vmatpush1.msra.mxu0 0.0
        %216 = vmatprep.subr.mxu0 0.0
        %217 = vmatpush1.msra.mxu0 0.0
        %218 = vmatprep.subr.mxu0 0.0
        %219 = vmatpush1.msra.mxu0 0.0
        %220 = vmatprep.subr.mxu0 0.0
        %221 = vmatpush1.msra.mxu0 0.0
        %222 = vmatprep.subr.mxu0 0.0
        %223 = vmatpush1.msra.mxu0 0.0
        %224 = vmatprep.subr.mxu0 0.0
        %225 = vmatpush1.msra.mxu0 0.0
        %226 = vmatprep.subr.mxu0 0.0
        %227 = vmatpush1.msra.mxu0 0.0
        %228 = vmatprep.mubr.f32.mxu0 0.0
        %229 = vmatmul.mubr.f32.gmra.mrb[0].mxu0 %v153
        %v230 = vpop.f32.mrb[0].mxu0
        %v231 = vadd.f32 0.0, %v230
        %v232 = vpop.f32.mrb[0].mxu0
        %233 = vmatprep.mubr.f32.mxu0 0.0
        %234 = vmatmul.mubr.f32.gmra.mrb[0].mxu0 %v156
        %v235 = vpop.f32.mrb[0].mxu0
        %v236 = vadd.f32 0.0, %v235
        %v237 = vpop.f32.mrb[0].mxu0
        %238 = vmatprep.mubr.f32.mxu0 0.0
        %239 = vmatmul.mubr.f32.gmra.mrb[0].mxu0 %v159
        %v240 = vpop.f32.mrb[0].mxu0
        %v241 = vadd.f32 0.0, %v240
        %v242 = vpop.f32.mrb[0].mxu0
        %243 = vmatprep.mubr.f32.mxu0 0.0
        %244 = vmatmul.mubr.f32.gmra.mrb[0].mxu0 %v162
        %v245 = vpop.f32.mrb[0].mxu0
        %v246 = vadd.f32 0.0, %v245
        %v247 = vpop.f32.mrb[0].mxu0
        %248 = vdwg.mxu0
        %v249 = vpack.c.bf16 %v236, %v231
        %v250 = vpack.c.bf16 %v246, %v241
        %v253 = vunpack.c.l.b16 %v249
        %v254 = vunpack.c.h.b16 %v249
        %v255 = vunpack.c.l.b16 %v250
        %v256 = vunpack.c.h.b16 %v250
        %v257 = vpack.c.b16 %v253, %v253
        %v258 = vpack.c.b16 %v254, %v254
        %v259 = vpack.c.b16 %v255, %v255
        %v260 = vpack.c.b16 %v256, %v256
        %265 = vst [vmem:[%s137] sm:$0xf] %v257
        %266 = vst [vmem:[%s137 + $0x4] sm:$0xf] %v258
        %267 = vst [vmem:[%s137 + $0x8] sm:$0xf] %v259
        %268 = vst [vmem:[%s137 + $0xc] sm:$0xf] %v260
        %s269 = sand.u32 %s71, 1
        %s270 = scalar_lea.sflag [#allocation3], %s269
        %s271 = sand.u32 %s71, 1
        %s272 = smul.addr %s271, 16
        %s273 = scalar_lea.vmem [#allocation2], %s272
        // Predicated region
        $region29: #{tpu_custom_call.1} parent=27 // pred_check
          %p274 = pneg %p81
        $region30: #{tpu_custom_call.1} parent=27 // pred_check_branch
          %276 = sbr.rel (%p274) target = $region32
        $region31: #{tpu_custom_call.1} parent=27 // pred_region
          %s277 = smul.u32 4, %s16
          %s279 = ssub.s32 256, 256
          %280 = vsyncadd %s270, %s279
          %s281 = smul.addr %s277, 64
          %s282 = scalar_lea.hbm %s2, %s281
          %s283 = sshll.u32 %s273, 4
          %s284 = int_to_ptr.vmem [resolvable:$true] %s283
          %289 = dma.vmem_to_hbm [thread:$0]  %s284, 256, %s282, %s270, 64, 64, 4
        $region32: #{tpu_custom_call.1} parent=27 // pred_fallthru
          _
      $region28: #{tpu_custom_call.1} parent=5 // pred_fallthru
        _
      %p290 = scmp.le.s32.totalorder 2, %s11
      // Predicated region
      $region33: #{tpu_custom_call.1} parent=5 // pred_check
        %p291 = pneg %p290
      $region34: #{tpu_custom_call.1} parent=5 // pred_check_branch
        %293 = sbr.rel (%p291) target = $region36
      $region35: #{tpu_custom_call.1} parent=5 // pred_region
        %s294 = ssub.s32 %s11, 2
        // Predicated region
        $region37: #{tpu_custom_call.1} parent=35 // pred_check
          %p295 = pneg %p87
        $region38: #{tpu_custom_call.1} parent=35 // pred_check_branch
          %297 = sbr.rel (%p295) target = $region40
        $region39: #{tpu_custom_call.1} parent=35 // pred_region
          %s298 = sand.u32 %s72, 1
          %s299 = scalar_lea.sflag [#allocation3], %s298
          %s300 = sand.u32 %s72, 1
          %s301 = smul.addr %s300, 16
          %s302 = scalar_lea.vmem [#allocation2], %s301
          %303 = dma.done %s299, 256
        $region40: #{tpu_custom_call.1} parent=35 // pred_fallthru
          _
      $region36: #{tpu_custom_call.1} parent=5 // pred_fallthru
        _
    $region6: #{tpu_custom_call.1} parent=1 // loop_footer
      %s15 = sadd.s32 1, %s11
    $region7: #{tpu_custom_call.1} parent=1 // loop_footer_branch
      %10 = sbr.rel target = $region3
    $region8: #{tpu_custom_call.1} parent=1 // loop_exit
      _
    %304 = vsyncpa [#allocation3], 1
    %s305 = scalar_lea.sflag [#allocation3], 1
    %306 = vsyncpa %s305, 1

// kernel: tpu_custom_call.1
$region0: #{tpu_custom_call.1}
  #allocation0 [shape = 'u32[]', space=smem, size = 0x4, offset = 0x4, fixed_abs, tag = 'smem constant byte address 0x4 - core index']
  #allocation1 [shape = 'u32[144,128]{1,0:T(1,128)}', space=vmem, size = 0x12000, scoped, tag = 'internal scratch']
  %s0 = inlined_call_operand.vmem [shape: f32[64,16], index: 0, kind: input, shape index: {}]
  %s1 = inlined_call_operand.vmem [shape: f32[16,128], index: 1, kind: input, shape index: {}]
  %s2 = inlined_call_operand.hbm [shape: bf16[64,128], index: 2, kind: output, shape index: {}]
  %s3 = sld [smem:[#allocation0]]
  $region41: #{tpu_custom_call.1} parent=0
    _
  %s5 = ssub.s32 1, %s3
  %s6 = scalar_select 0, %s5, %s3
  $region1: #{tpu_custom_call.1} parent=0
    #allocation2 [shape = 'u8[16384]{0}', space=vmem, size = 0x4000, scoped, tag = 'output window, operand 0']
    #allocation3 [shape = 's32[2]{0}', space=sflag, size = 0x8, scoped, tag = 'scoped memory for tpu_custom_call.1']
    %7 = vsyncpa [#allocation3], 0
    %s8 = scalar_lea.sflag [#allocation3], 1
    %9 = vsyncpa %s8, 0
    loop: start=0, step=1, limit=4
    $region2: #{tpu_custom_call.1} parent=1 // loop_pre_header
      _
    $region3: #{tpu_custom_call.1} parent=1 // loop_header
      %s11 = sphi 0, %s15
      %p12 = scmp.ge.s32.totalorder %s11, 4
      %s21 = sphi 0, %s23
      %s24 = sphi 0, %s21
      %s25 = sphi 0, %s24
      %s41 = sphi 0, %s25
      %s45 = sphi 0, %s45
      %s47 = sphi 0, %s45
      %s48 = sphi 0, %s47
      %s62 = sphi 0, %s48
      %s68 = sphi 0, %s70
      %s71 = sphi 0, %s68
      %s72 = sphi 0, %s71
      %s88 = sphi 0, %s72
    $region4: #{tpu_custom_call.1} parent=1 // loop_header_branch
      %14 = sbr.rel (%p12) target = $region8
    $region5: #{tpu_custom_call.1} parent=1 // loop_body
      %s16 = ssub.s32 %s11, 1
      %s17 = ssub.s32 %s11, 2
      %s18 = sadd.s32 %s11, 1
      %s19 = ssub.s32 %s11, %s18
      %p20 = scmp.eq.s32.totalorder %s19, 0
      %s22 = sadd.s32 %s21, 1
      %s23 = scalar_select %p20, %s21, %s22
      %p26 = pneg %p20
      %p27 = scmp.eq.s32.totalorder %s11, 1
      %p28 = por %p26, %p27
      %p29 = scmp.ne.s32.totalorder %s21, %s24
      %p30 = scmp.eq.s32.totalorder %s11, 0
      %p31 = por %p29, %p30
      %p32 = scmp.ne.s32.totalorder %s21, %s24
      %p33 = scmp.eq.s32.totalorder %s16, 1
      %p34 = por %p32, %p33
      %p35 = scmp.ne.s32.totalorder %s24, %s25
      %p36 = scmp.eq.s32.totalorder %s16, 0
      %p37 = por %p35, %p36
      %p38 = scmp.ne.s32.totalorder %s24, %s25
      %p39 = scmp.eq.s32.totalorder %s17, 1
      %p40 = por %p38, %p39
      %p42 = scmp.ne.s32.totalorder %s25, %s41
      %p43 = scmp.eq.s32.totalorder %s17, 0
      %p44 = por %p42, %p43
      %s46 = sadd.s32 %s45, 1
      %p49 = scmp.eq.s32.totalorder %s11, 1
      %p50 = scmp.ne.s32.totalorder %s45, %s47
      %p51 = scmp.eq.s32.totalorder %s11, 0
      %p52 = por %p50, %p51
      %p53 = scmp.ne.s32.totalorder %s45, %s47
      %p54 = scmp.eq.s32.totalorder %s16, 1
      %p55 = por %p53, %p54
      %p56 = scmp.ne.s32.totalorder %s47, %s48
      %p57 = scmp.eq.s32.totalorder %s16, 0
      %p58 = por %p56, %p57
      %p59 = scmp.ne.s32.totalorder %s47, %s48
      %p60 = scmp.eq.s32.totalorder %s17, 1
      %p61 = por %p59, %p60
      %p63 = scmp.ne.s32.totalorder %s48, %s62
      %p64 = scmp.eq.s32.totalorder %s17, 0
      %p65 = por %p63, %p64
      %s66 = ssub.s32 %s11, %s18
      %p67 = scmp.eq.s32.totalorder %s66, 0
      %s69 = sadd.s32 %s68, 1
      %s70 = scalar_select %p67, %s68, %s69
      %p73 = pneg %p67
      %p74 = scmp.eq.s32.totalorder %s11, 1
      %p75 = por %p73, %p74
      %p76 = scmp.ne.s32.totalorder %s68, %s71
      %p77 = scmp.eq.s32.totalorder %s11, 0
      %p78 = por %p76, %p77
      %p79 = scmp.ne.s32.totalorder %s68, %s71
      %p80 = scmp.eq.s32.totalorder %s16, 1
      %p81 = por %p79, %p80
      %p82 = scmp.ne.s32.totalorder %s71, %s72
      %p83 = scmp.eq.s32.totalorder %s16, 0
      %p84 = por %p82, %p83
      %p85 = scmp.ne.s32.totalorder %s71, %s72
      %p86 = scmp.eq.s32.totalorder %s17, 1
      %p87 = por %p85, %p86
      %p89 = scmp.ne.s32.totalorder %s72, %s88
      %p90 = scmp.eq.s32.totalorder %s17, 0
      %p91 = por %p89, %p90
      %p92 = scmp.le.s32.totalorder 1, %s11
      %p93 = scmp.lt.s32.totalorder %s11, 3
      %p94 = pnand %p92, %p93
      %p95 = pneg %p94
      // Predicated region
      $region9: #{tpu_custom_call.1} parent=5 // pred_check
        _
      $region10: #{tpu_custom_call.1} parent=5 // pred_check_branch
        %97 = sbr.rel (%p94) target = $region12
      $region11: #{tpu_custom_call.1} parent=5 // pred_region
        %s98 = ssub.s32 %s11, 1
        // Predicated region
        $region13: #{tpu_custom_call.1} parent=11 // pred_check
          %p99 = pneg %p58
        $region14: #{tpu_custom_call.1} parent=11 // pred_check_branch
          %101 = sbr.rel (%p99) target = $region16
        $region15: #{tpu_custom_call.1} parent=11 // pred_region
          _
        $region16: #{tpu_custom_call.1} parent=11 // pred_fallthru
          _
      $region12: #{tpu_custom_call.1} parent=5 // pred_fallthru
        _
      %p102 = scmp.lt.s32.totalorder %s11, 2
      // Predicated region
      $region17: #{tpu_custom_call.1} parent=5 // pred_check
        %p103 = pneg %p102
      $region18: #{tpu_custom_call.1} parent=5 // pred_check_branch
        %105 = sbr.rel (%p103) target = $region20
      $region19: #{tpu_custom_call.1} parent=5 // pred_region
        // Predicated region
        $region21: #{tpu_custom_call.1} parent=19 // pred_check
          %p106 = pneg %p31
        $region22: #{tpu_custom_call.1} parent=19 // pred_check_branch
          %108 = sbr.rel (%p106) target = $region24
        $region23: #{tpu_custom_call.1} parent=19 // pred_region
          %s109 = smul.u32 4, %s11
          %p110 = scmp.lt.s32.totalorder %s109, 7
          %s111 = scalar_select %p110, %s109, 7
          %s112 = smul.addr %s111, 8
          %s113 = scalar_lea.vmem %s0, %s112
          %s114 = smul.u32 4, %s11
        $region24: #{tpu_custom_call.1} parent=19 // pred_fallthru
          _
      $region20: #{tpu_custom_call.1} parent=5 // pred_fallthru
        _
      %p115 = scmp.le.s32.totalorder 1, %s11
      %p116 = scmp.lt.s32.totalorder %s11, 3
      %p117 = pnand %p115, %p116
      %p118 = pneg %p117
      // Predicated region
      $region25: #{tpu_custom_call.1} parent=5 // pred_check
        _
      $region26: #{tpu_custom_call.1} parent=5 // pred_check_branch
        %120 = sbr.rel (%p117) target = $region28
      $region27: #{tpu_custom_call.1} parent=5 // pred_region
        %s121 = ssub.s32 %s11, 1
        %s122 = smul.u32 4, %s16
        %p123 = scmp.lt.s32.totalorder %s122, 7
        %s124 = scalar_select %p123, %s122, 7
        %s125 = smul.addr %s124, 8
        %s126 = scalar_lea.vmem %s0, %s125
        %p127 = pneg %p37
        %p128 = pneg %p34
        %p129 = pneg %p58
        %p130 = pneg %p55
        %p131 = pneg %p84
        %p132 = pneg %p81
        %s133 = sand.u32 %s71, 1
        %s134 = scalar_lea.sflag [#allocation3], %s133
        %s135 = sand.u32 %s71, 1
        %s136 = smul.addr %s135, 16
        %s137 = scalar_lea.vmem [#allocation2], %s136
        %s138 = smul.u32 4, %s16
        %p139 = scmp.lt.s32.totalorder %s138, 7
        %s140 = scalar_select %p139, %s138, 7
        %s141 = smul.addr %s140, 8
        %s142 = scalar_lea.vmem %s0, %s141
        %s143 = smul.u32 4, %s16
        %s144 = smul.u32 4, %s16
        %v145 = vld [vmem:[%s142] sm:$0xff]
        %v146 = vld [vmem:[%s142 + $0x8] sm:$0xff]
        %v147 = vld [vmem:[%s142 + $0x10] sm:$0xff]
        %v148 = vld [vmem:[%s142 + $0x18] sm:$0xff]
        %v149 = vld [vmem:[%s1] sm:$0xff]
        %v150 = vld [vmem:[%s1 + $0x8] sm:$0xff]
        %vm151 = vcmask 130048
        %v153 = vsel %vm151, %v145, 0
        %v156 = vsel %vm151, %v146, 0
        %v159 = vsel %vm151, %v147, 0
        %v162 = vsel %vm151, %v148, 0
        %164 = vmatprep.subr.mxu0 0.0
        %165 = vmatpush1.msra.mxu0 %v149
        %166 = vmatprep.subr.mxu0 0.0
        %167 = vmatpush1.msra.mxu0 %v150
        %168 = vmatprep.subr.mxu0 0.0
        %169 = vmatpush1.msra.mxu0 0.0
        %170 = vmatprep.subr.mxu0 0.0
        %171 = vmatpush1.msra.mxu0 0.0
        %172 = vmatprep.subr.mxu0 0.0
        %173 = vmatpush1.msra.mxu0 0.0
        %174 = vmatprep.subr.mxu0 0.0
        %175 = vmatpush1.msra.mxu0 0.0
        %176 = vmatprep.subr.mxu0 0.0
        %177 = vmatpush1.msra.mxu0 0.0
        %178 = vmatprep.subr.mxu0 0.0
        %179 = vmatpush1.msra.mxu0 0.0
        %180 = vmatprep.subr.mxu0 0.0
        %181 = vmatpush1.msra.mxu0 0.0
        %182 = vmatprep.subr.mxu0 0.0
        %183 = vmatpush1.msra.mxu0 0.0
        %184 = vmatprep.subr.mxu0 0.0
        %185 = vmatpush1.msra.mxu0 0.0
        %186 = vmatprep.subr.mxu0 0.0
        %187 = vmatpush1.msra.mxu0 0.0
        %188 = vmatprep.subr.mxu0 0.0
        %189 = vmatpush1.msra.mxu0 0.0
        %190 = vmatprep.subr.mxu0 0.0
        %191 = vmatpush1.msra.mxu0 0.0
        %192 = vmatprep.subr.mxu0 0.0
        %193 = vmatpush1.msra.mxu0 0.0
        %194 = vmatprep.subr.mxu0 0.0
        %195 = vmatpush1.msra.mxu0 0.0
        %196 = vmatprep.subr.mxu0 0.0
        %197 = vmatpush1.msra.mxu0 0.0
        %198 = vmatprep.subr.mxu0 0.0
        %199 = vmatpush1.msra.mxu0 0.0
        %200 = vmatprep.subr.mxu0 0.0
        %201 = vmatpush1.msra.mxu0 0.0
        %202 = vmatprep.subr.mxu0 0.0
        %203 = vmatpush1.msra.mxu0 0.0
        %204 = vmatprep.subr.mxu0 0.0
        %205 = vmatpush1.msra.mxu0 0.0
        %206 = vmatprep.subr.mxu0 0.0
        %207 = vmatpush1.msra.mxu0 0.0
        %208 = vmatprep.subr.mxu0 0.0
        %209 = vmatpush1.msra.mxu0 0.0
        %210 = vmatprep.subr.mxu0 0.0
        %211 = vmatpush1.msra.mxu0 0.0
        %212 = vmatprep.subr.mxu0 0.0
        %213 = vmatpush1.msra.mxu0 0.0
        %214 = vmatprep.subr.mxu0 0.0
        %215 = vmatpush1.msra.mxu0 0.0
        %216 = vmatprep.subr.mxu0 0.0
        %217 = vmatpush1.msra.mxu0 0.0
        %218 = vmatprep.subr.mxu0 0.0
        %219 = vmatpush1.msra.mxu0 0.0
        %220 = vmatprep.subr.mxu0 0.0
        %221 = vmatpush1.msra.mxu0 0.0
        %222 = vmatprep.subr.mxu0 0.0
        %223 = vmatpush1.msra.mxu0 0.0
        %224 = vmatprep.subr.mxu0 0.0
        %225 = vmatpush1.msra.mxu0 0.0
        %226 = vmatprep.subr.mxu0 0.0
        %227 = vmatpush1.msra.mxu0 0.0
        %228 = vmatprep.mubr.f32.mxu0 0.0
        %229 = vmatmul.mubr.f32.gmra.mrb[0].mxu0 %v153
        %v230 = vpop.f32.mrb[0].mxu0
        %v231 = vadd.f32 0.0, %v230
        %v232 = vpop.f32.mrb[0].mxu0
        %233 = vmatprep.mubr.f32.mxu0 0.0
        %234 = vmatmul.mubr.f32.gmra.mrb[0].mxu0 %v156
        %v235 = vpop.f32.mrb[0].mxu0
        %v236 = vadd.f32 0.0, %v235
        %v237 = vpop.f32.mrb[0].mxu0
        %238 = vmatprep.mubr.f32.mxu0 0.0
        %239 = vmatmul.mubr.f32.gmra.mrb[0].mxu0 %v159
        %v240 = vpop.f32.mrb[0].mxu0
        %v241 = vadd.f32 0.0, %v240
        %v242 = vpop.f32.mrb[0].mxu0
        %243 = vmatprep.mubr.f32.mxu0 0.0
        %244 = vmatmul.mubr.f32.gmra.mrb[0].mxu0 %v162
        %v245 = vpop.f32.mrb[0].mxu0
        %v246 = vadd.f32 0.0, %v245
        %v247 = vpop.f32.mrb[0].mxu0
        %248 = vdwg.mxu0
        %v249 = vpack.c.bf16 %v236, %v231
        %v250 = vpack.c.bf16 %v246, %v241
        %v253 = vunpack.c.l.b16 %v249
        %v254 = vunpack.c.h.b16 %v249
        %v255 = vunpack.c.l.b16 %v250
        %v256 = vunpack.c.h.b16 %v250
        %v257 = vpack.c.b16 %v253, %v253
        %v258 = vpack.c.b16 %v254, %v254
        %v259 = vpack.c.b16 %v255, %v255
        %v260 = vpack.c.b16 %v256, %v256
        %265 = vst [vmem:[%s137] sm:$0xf] %v257
        %266 = vst [vmem:[%s137 + $0x4] sm:$0xf] %v258
        %267 = vst [vmem:[%s137 + $0x8] sm:$0xf] %v259
        %268 = vst [vmem:[%s137 + $0xc] sm:$0xf] %v260
        %s269 = sand.u32 %s71, 1
        %s270 = scalar_lea.sflag [#allocation3], %s269
        %s271 = sand.u32 %s71, 1
        %s272 = smul.addr %s271, 16
        %s273 = scalar_lea.vmem [#allocation2], %s272
        // Predicated region
        $region29: #{tpu_custom_call.1} parent=27 // pred_check
          %p274 = pneg %p81
        $region30: #{tpu_custom_call.1} parent=27 // pred_check_branch
          %276 = sbr.rel (%p274) target = $region32
        $region31: #{tpu_custom_call.1} parent=27 // pred_region
          %s277 = smul.u32 4, %s16
          %s279 = ssub.s32 256, 256
          %280 = vsyncadd %s270, %s279
          %s281 = smul.addr %s277, 64
          %s282 = scalar_lea.hbm %s2, %s281
          %s283 = sshll.u32 %s273, 4
          %s284 = int_to_ptr.vmem [resolvable:$true] %s283
          %289 = dma.vmem_to_hbm [thread:$0]  %s284, 256, %s282, %s270, 64, 64, 4
        $region32: #{tpu_custom_call.1} parent=27 // pred_fallthru
          _
      $region28: #{tpu_custom_call.1} parent=5 // pred_fallthru
        _
      %p290 = scmp.le.s32.totalorder 2, %s11
      // Predicated region
      $region33: #{tpu_custom_call.1} parent=5 // pred_check
        %p291 = pneg %p290
      $region34: #{tpu_custom_call.1} parent=5 // pred_check_branch
        %293 = sbr.rel (%p291) target = $region36
      $region35: #{tpu_custom_call.1} parent=5 // pred_region
        %s294 = ssub.s32 %s11, 2
        // Predicated region
        $region37: #{tpu_custom_call.1} parent=35 // pred_check
          %p295 = pneg %p87
        $region38: #{tpu_custom_call.1} parent=35 // pred_check_branch
          %297 = sbr.rel (%p295) target = $region40
        $region39: #{tpu_custom_call.1} parent=35 // pred_region
          %s298 = sand.u32 %s72, 1
          %s299 = scalar_lea.sflag [#allocation3], %s298
          %s300 = sand.u32 %s72, 1
          %s301 = smul.addr %s300, 16
          %s302 = scalar_lea.vmem [#allocation2], %s301
          %303 = dma.done %s299, 256
        $region40: #{tpu_custom_call.1} parent=35 // pred_fallthru
          _
      $region36: #{tpu_custom_call.1} parent=5 // pred_fallthru
        _
    $region6: #{tpu_custom_call.1} parent=1 // loop_footer
      %s15 = sadd.s32 1, %s11
    $region7: #{tpu_custom_call.1} parent=1 // loop_footer_branch
      %10 = sbr.rel target = $region3
    $region8: #{tpu_custom_call.1} parent=1 // loop_exit
      _
    %304 = vsyncpa [#allocation3], 1
    %s305 = scalar_lea.sflag [#allocation3], 1
    %306 = vsyncpa %s305, 1

</llo_original>
